<compile_context>
chip_gen: v6e
topology: v6e:2x2x1
jax: 0.10.0
libtpu: 0.0.40
codegen_flags: <defaults>
</compile_context>

<pallas_src>
import math

import jax
import jax.numpy as jnp
from jax.experimental import pallas as pl
from jax.experimental.pallas import tpu as pltpu


def _round_up(x, m):
    return (x + m - 1) // m * m


def _vmem_capacity_bytes():
    try:
        return int(pltpu.get_tpu_info().vmem_capacity_bytes)
    except Exception:
        return 64 * 1024 * 1024  # conservative (v7x per-TC physical)


def _has_buffered():
    return hasattr(pl, "Buffered")


def _invariant_spec(shape):
    """BlockSpec for a grid-invariant block; single-buffered when supported."""
    idx = lambda i: (0, 0)
    if _has_buffered():
        try:
            return pl.BlockSpec(shape, idx, pipeline_mode=pl.Buffered(1))
        except TypeError:
            pass
    return pl.BlockSpec(shape, idx)


def _vmem_estimate(tile_n, h_pad, in_bytes, out_bytes, weight_bufs):
    """Per-call VMEM footprint for the split-matmul kernel."""
    weights = 2 * h_pad * h_pad * in_bytes * weight_bufs      # WxT + WnT (resident)
    bias = 8 * h_pad * 4 * weight_bufs                        # (2,Hp) f32, padded rows
    ins = 2 * tile_n * h_pad * in_bytes * 2                   # user+cascade, double buf
    outs = tile_n * h_pad * out_bytes * 2                     # output, double buf
    tmps = 4 * tile_n * h_pad * 4                             # xu_raw, xn_raw, gate, prod (f32)
    return weights + bias + ins + outs + tmps


def _based_encoder_kernel(user_ref, cascade_ref, wxT_ref, wnT_ref, b_ref, out_ref):
    # Two independent Hp x Hp MXU matmuls with f32 accumulation.
    xu_raw = jnp.dot(user_ref[...], wxT_ref[...], preferred_element_type=jnp.float32)
    xn_raw = jnp.dot(cascade_ref[...], wnT_ref[...], preferred_element_type=jnp.float32)
    b = b_ref[...].astype(jnp.float32)            # row0 = bx, row1 = bx + bn + para
    xu = xu_raw + b[0:1, :]                       # user @ Wx^T + bx
    gate = jax.nn.sigmoid(xu_raw + xn_raw + b[1:2, :])   # sigmoid(xu + xn + para)
    out_ref[...] = (xu * gate).astype(out_ref.dtype)


def prepare_params(wx, bx, wn, bn, para, h_pad, compute_dtype):
    """Pad + transpose nn.Linear weights to [Hp, Hp]; build fused (2, Hp) bias.

    Pad lanes are exactly zero (weights and bias), so padded output lanes are
    xu=0 -> out=0; the wrapper slices them away regardless.
    """
    H = wx.shape[0]

    def pad_wT(w):
        wt = jnp.zeros((h_pad, h_pad), jnp.float32).at[:H, :H].set(w.T)
        return wt.astype(compute_dtype)

    b = jnp.zeros((2, h_pad), jnp.float32)
    b = b.at[0, :H].set(bx)
    b = b.at[1, :H].set(bx + bn + para)
    return pad_wT(wx), pad_wT(wn), b               # bias stays f32


def based_encoder(user, cascade, wx, bx, wn, bn, para, *,
                  tile_n=None, compute_dtype=jnp.bfloat16, out_dtype=None):
    N, H = user.shape
    if out_dtype is None:
        out_dtype = user.dtype
    h_pad = _round_up(H, 128)                      # lane-dense feature axis

    in_bytes = jnp.dtype(compute_dtype).itemsize
    out_bytes = jnp.dtype(out_dtype).itemsize
    weight_bufs = 1 if _has_buffered() else 2

    # Generation-aware VMEM budget (v5e/v6e: 128 MiB physical, v7x: 64 MiB).
    cap = _vmem_capacity_bytes()
    budget = min(cap // 2, 48 * 1024 * 1024)
    vmem_limit = min(int(cap * 0.75), 96 * 1024 * 1024)

    # --- tile sizing: large enough to amortize ~0.35us/step, under budget.
    if tile_n is None:
        tile_n = min(1024, _round_up(N, 16))
    tile_n = max(16, _round_up(tile_n, 16))
    # v7x has 2 TensorCores: make sure the parallel batch axis has >=2 steps.
    if N > 16 and pl.cdiv(N, tile_n) < 2:
        tile_n = max(16, _round_up(pl.cdiv(N, 2), 16))
    while tile_n > 16 and _vmem_estimate(tile_n, h_pad, in_bytes, out_bytes,
                                         weight_bufs) > budget:
        tile_n = max(16, _round_up(tile_n // 2, 16))
    n_pad = _round_up(N, tile_n)                   # ragged batches via zero-pad

    def pad_cast(x):
        return jnp.pad(x, ((0, n_pad - N), (0, h_pad - H))).astype(compute_dtype)

    user_p = pad_cast(user)
    cascade_p = pad_cast(cascade)
    wxT, wnT, b_fused = prepare_params(wx, bx, wn, bn, para, h_pad, compute_dtype)

    out = pl.pallas_call(
        _based_encoder_kernel,
        out_shape=jax.ShapeDtypeStruct((n_pad, h_pad), out_dtype),
        grid_spec=pltpu.PrefetchScalarGridSpec(
            num_scalar_prefetch=0,
            grid=(n_pad // tile_n,),
            in_specs=[
                pl.BlockSpec((tile_n, h_pad), lambda i: (i, 0)),   # user tile
                pl.BlockSpec((tile_n, h_pad), lambda i: (i, 0)),   # cascade tile
                _invariant_spec((h_pad, h_pad)),                   # Wx^T (resident)
                _invariant_spec((h_pad, h_pad)),                   # Wn^T (resident)
                _invariant_spec((2, h_pad)),                       # fused bias
            ],
            out_specs=pl.BlockSpec((tile_n, h_pad), lambda i: (i, 0)),
        ),
        compiler_params=pltpu.CompilerParams(
            dimension_semantics=("parallel",),      # v7x: 2 TCs split the batch axis
            vmem_limit_bytes=vmem_limit,
        ),
    )(user_p, cascade_p, wxT, wnT, b_fused)

    return out[:N, :H]


def reference(user, cascade, wx, bx, wn, bn, para):
    xu = user @ wx.T + bx
    xn = cascade @ wn.T + bn
    gate = jax.nn.sigmoid(xu + xn + para)
    return xu * gate


def _make_params(key, hidden):
    ks = jax.random.split(key, 5)
    bound = 1.0 / math.sqrt(hidden)   # mimic nn.Linear default init range
    wx = jax.random.uniform(ks[0], (hidden, hidden), jnp.float32, -bound, bound)
    bx = jax.random.uniform(ks[1], (hidden,), jnp.float32, -bound, bound)
    wn = jax.random.uniform(ks[2], (hidden, hidden), jnp.float32, -bound, bound)
    bn = jax.random.uniform(ks[3], (hidden,), jnp.float32, -bound, bound)
    para = jax.random.uniform(ks[4], (hidden,), jnp.float32, -bound, bound)
    return wx, bx, wn, bn, para


if __name__ == "__main__":
    root = jax.random.PRNGKey(0)
    k_small, k_large = jax.random.split(root, 2)

    # Case 1: module-sized problem (N=8, H=32), f32 compute/output.
    # Verification-only path (tight tolerance); production default is bf16.
    # Exercises the padded lane-dense path (H=32 -> Hp=128, N=8 -> 16).
    N, H = 8, 32
    kp, ku, kc = jax.random.split(k_small, 3)
    wx, bx, wn, bn, para = _make_params(kp, H)
    user = jax.random.normal(ku, (N, H), jnp.float32)
    cascade = jax.random.normal(kc, (N, H), jnp.float32)
    out = based_encoder(user, cascade, wx, bx, wn, bn, para,
                        compute_dtype=jnp.float32)
    out = jax.block_until_ready(out)
    ref = reference(user, cascade, wx, bx, wn, bn, para)
    assert out.shape == (N, H)
    assert jnp.allclose(out, ref, atol=1e-4, rtol=1e-4), "f32 case mismatch"

    # Case 2: lane-aligned fast path, bf16 compute + bf16 output, 2-step grid.
    N, H = 256, 128
    kp, ku, kc = jax.random.split(k_large, 3)
    wx, bx, wn, bn, para = _make_params(kp, H)
    user = jax.random.normal(ku, (N, H), jnp.float32)
    cascade = jax.random.normal(kc, (N, H), jnp.float32)
    out = based_encoder(user, cascade, wx, bx, wn, bn, para,
                        tile_n=128, compute_dtype=jnp.bfloat16,
                        out_dtype=jnp.bfloat16)
    out = jax.block_until_ready(out)
    assert out.shape == (N, H)
    assert out.dtype == jnp.bfloat16
    out32 = out.astype(jnp.float32)

    q = lambda a: a.astype(jnp.bfloat16).astype(jnp.float32)
    ref_q = reference(q(user), q(cascade), q(wx), bx, q(wn), bn, para)  # same quantization
    ref_f = reference(user, cascade, wx, bx, wn, bn, para)              # true f32 semantics
    assert jnp.allclose(out32, ref_q, atol=2e-2, rtol=2e-2), "bf16 kernel mismatch"
    assert jnp.allclose(out32, ref_f, atol=8e-2, rtol=8e-2), "bf16 drift vs f32 too large"

    print("KERNEL_OK")
</pallas_src>

<mosaic_0001>
module attributes {stable_mosaic.version = 11 : i64} {
  func.func @_based_encoder_kernel(%arg0: i32, %arg1: memref<16x128xf32, #tpu.memory_space<vmem>>, %arg2: memref<16x128xf32, #tpu.memory_space<vmem>>, %arg3: memref<128x128xf32, #tpu.memory_space<vmem>>, %arg4: memref<128x128xf32, #tpu.memory_space<vmem>>, %arg5: memref<2x128xf32, #tpu.memory_space<vmem>>, %arg6: memref<16x128xf32, #tpu.memory_space<vmem>>) attributes {dimension_semantics = [#tpu.dimension_semantics<parallel>], iteration_bounds = array<i64: 1>, scalar_prefetch = 0 : i64, scratch_operands = 0 : i64, tpu.core_type = #tpu.core_type<tc>, window_params = [{transform_indices = @transform_0, window_bounds = array<i64: 16, 128>}, {transform_indices = @transform_1, window_bounds = array<i64: 16, 128>}, {pipeline_mode = #tpu.pipeline_mode<synchronous>, transform_indices = @transform_2, window_bounds = array<i64: 128, 128>}, {pipeline_mode = #tpu.pipeline_mode<synchronous>, transform_indices = @transform_3, window_bounds = array<i64: 128, 128>}, {pipeline_mode = #tpu.pipeline_mode<synchronous>, transform_indices = @transform_4, window_bounds = array<i64: 2, 128>}, {transform_indices = @transform_5, window_bounds = array<i64: 16, 128>}]} {
    %c0 = arith.constant 0 : index
    %c0_0 = arith.constant 0 : index
    %0 = vector.load %arg1[%c0, %c0_0] : memref<16x128xf32, #tpu.memory_space<vmem>>, vector<16x128xf32>
    %c0_1 = arith.constant 0 : index
    %c0_2 = arith.constant 0 : index
    %1 = vector.load %arg3[%c0_1, %c0_2] : memref<128x128xf32, #tpu.memory_space<vmem>>, vector<128x128xf32>
    %cst = arith.constant dense<0.000000e+00> : vector<16x128xf32>
    %2 = tpu.matmul %0, %1, %cst {dimension_numbers = #tpu.dot_dimension_numbers<[1], [0], [0], [1], [0, 0, 1, 1], [], []>} : vector<16x128xf32>, vector<128x128xf32>, vector<16x128xf32> -> vector<16x128xf32>
    %c0_3 = arith.constant 0 : index
    %c0_4 = arith.constant 0 : index
    %3 = vector.load %arg2[%c0_3, %c0_4] : memref<16x128xf32, #tpu.memory_space<vmem>>, vector<16x128xf32>
    %c0_5 = arith.constant 0 : index
    %c0_6 = arith.constant 0 : index
    %4 = vector.load %arg4[%c0_5, %c0_6] : memref<128x128xf32, #tpu.memory_space<vmem>>, vector<128x128xf32>
    %cst_7 = arith.constant dense<0.000000e+00> : vector<16x128xf32>
    %5 = tpu.matmul %3, %4, %cst_7 {dimension_numbers = #tpu.dot_dimension_numbers<[1], [0], [0], [1], [0, 0, 1, 1], [], []>} : vector<16x128xf32>, vector<128x128xf32>, vector<16x128xf32> -> vector<16x128xf32>
    %c0_8 = arith.constant 0 : index
    %c0_9 = arith.constant 0 : index
    %6 = vector.load %arg5[%c0_8, %c0_9] : memref<2x128xf32, #tpu.memory_space<vmem>>, vector<2x128xf32>
    %7 = vector.extract_strided_slice %6 {offsets = [0, 0], sizes = [1, 128], strides = [1, 1]} : vector<2x128xf32> to vector<1x128xf32>
    %8 = vector.broadcast %7 : vector<1x128xf32> to vector<16x128xf32>
    %9 = arith.addf %2, %8 : vector<16x128xf32>
    %10 = arith.addf %2, %5 : vector<16x128xf32>
    %11 = vector.extract_strided_slice %6 {offsets = [1, 0], sizes = [1, 128], strides = [1, 1]} : vector<2x128xf32> to vector<1x128xf32>
    %12 = vector.broadcast %11 : vector<1x128xf32> to vector<16x128xf32>
    %13 = arith.addf %10, %12 : vector<16x128xf32>
    %14 = arith.negf %13 : vector<16x128xf32>
    %15 = math.exp %14 : vector<16x128xf32>
    %cst_10 = arith.constant 1.000000e+00 : f32
    %16 = vector.broadcast %cst_10 : f32 to vector<16x128xf32>
    %17 = arith.addf %16, %15 : vector<16x128xf32>
    %18 = arith.divf %16, %17 : vector<16x128xf32>
    %19 = arith.mulf %9, %18 : vector<16x128xf32>
    %c0_11 = arith.constant 0 : index
    %c0_12 = arith.constant 0 : index
    %20 = vector.load %arg6[%c0_11, %c0_12] : memref<16x128xf32, #tpu.memory_space<vmem>>, vector<16x128xf32>
    tpu.vector_store %arg6[%c0_11, %c0_12], %19 {strides = array<i32>} : memref<16x128xf32, #tpu.memory_space<vmem>>, vector<16x128xf32>,
    return
  }
  func.func @transform_0(%arg0: i32) -> (i32, i32) {
    %c0_i32 = arith.constant 0 : i32
    %c0_i32_0 = arith.constant 0 : i32
    return %arg0, %c0_i32 : i32, i32
  }
  func.func @transform_1(%arg0: i32) -> (i32, i32) {
    %c0_i32 = arith.constant 0 : i32
    %c0_i32_0 = arith.constant 0 : i32
    return %arg0, %c0_i32 : i32, i32
  }
  func.func @transform_2(%arg0: i32) -> (i32, i32) {
    %c0_i32 = arith.constant 0 : i32
    %c0_i32_0 = arith.constant 0 : i32
    %c0_i32_1 = arith.constant 0 : i32
    return %c0_i32, %c0_i32_0 : i32, i32
  }
  func.func @transform_3(%arg0: i32) -> (i32, i32) {
    %c0_i32 = arith.constant 0 : i32
    %c0_i32_0 = arith.constant 0 : i32
    %c0_i32_1 = arith.constant 0 : i32
    return %c0_i32, %c0_i32_0 : i32, i32
  }
  func.func @transform_4(%arg0: i32) -> (i32, i32) {
    %c0_i32 = arith.constant 0 : i32
    %c0_i32_0 = arith.constant 0 : i32
    %c0_i32_1 = arith.constant 0 : i32
    return %c0_i32, %c0_i32_0 : i32, i32
  }
  func.func @transform_5(%arg0: i32) -> (i32, i32) {
    %c0_i32 = arith.constant 0 : i32
    %c0_i32_0 = arith.constant 0 : i32
    return %arg0, %c0_i32 : i32, i32
  }
}

</mosaic_0001>

<llo_original>
// kernel: tpu_custom_call.1
$region0: #{tpu_custom_call.1}
  #allocation0 [shape = 'u32[]', space=smem, size = 0x4, offset = 0x4, fixed_abs, tag = 'smem constant byte address 0x4 - core index']
  #allocation1 [shape = 'u32[144,128]{1,0:T(1,128)}', space=vmem, size = 0x12000, scoped, tag = 'internal scratch']
  %s0 = inlined_call_operand.hbm [shape: f32[16,128], index: 0, kind: input, shape index: {}]
  %s1 = inlined_call_operand.hbm [shape: f32[16,128], index: 1, kind: input, shape index: {}]
  %s2 = inlined_call_operand.hbm [shape: f32[128,128], index: 2, kind: input, shape index: {}]
  %s3 = inlined_call_operand.hbm [shape: f32[128,128], index: 3, kind: input, shape index: {}]
  %s4 = inlined_call_operand.vmem [shape: f32[2,128], index: 4, kind: input, shape index: {}]
  %s5 = inlined_call_operand.hbm [shape: f32[16,128], index: 5, kind: output, shape index: {}]
  %s6 = sld [smem:[#allocation0]]
  $region46: #{tpu_custom_call.1} parent=0
    _
  %s8 = ssub.s32 1, %s6
  %s9 = scalar_select 0, %s8, %s6
  $region1: #{tpu_custom_call.1} parent=0
    #allocation2 [shape = 'u8[8192]{0}', space=vmem, size = 0x2000, scoped, tag = 'input window, operand 0, single buffered']
    #allocation3 [shape = 's32[1]{0}', space=sflag, size = 0x4, scoped, tag = 'scoped memory for tpu_custom_call.1']
    #allocation4 [shape = 's32[1]{0}', space=sflag, size = 0x4, scoped, tag = 'scoped memory for tpu_custom_call.1']
    #allocation5 [shape = 'u8[8192]{0}', space=vmem, size = 0x2000, scoped, tag = 'input window, operand 1, single buffered']
    #allocation6 [shape = 's32[1]{0}', space=sflag, size = 0x4, scoped, tag = 'scoped memory for tpu_custom_call.1']
    #allocation7 [shape = 'u8[65536]{0}', space=vmem, size = 0x10000, scoped, tag = 'input window, operand 2, single buffered']
    #allocation8 [shape = 'u8[65536]{0}', space=vmem, size = 0x10000, scoped, tag = 'input window, operand 3, single buffered']
    #allocation9 [shape = 's32[1]{0}', space=sflag, size = 0x4, scoped, tag = 'scoped memory for tpu_custom_call.1']
    #allocation10 [shape = 'u8[8192]{0}', space=vmem, size = 0x2000, scoped, tag = 'output window, operand 0, single buffered']
    %10 = vsyncpa [#allocation3], 0
    %11 = vsyncpa [#allocation6], 0
    %12 = vsyncpa [#allocation9], 0
    %13 = vsyncpa [#allocation4], 0
    // Predicated region
    $region2: #{tpu_custom_call.1} parent=1 // pred_check
      _
    $region3: #{tpu_custom_call.1} parent=1 // pred_check_branch
      %15 = sbr.rel (0) target = $region5
    $region4: #{tpu_custom_call.1} parent=1 // pred_region
      %s17 = ssub.s32 256, 256
      %18 = vsyncadd [#allocation3], %s17
      %s19 = sshll.u32 [#allocation2], 4
      %s20 = int_to_ptr.vmem [resolvable:$true] %s19
      %25 = dma.hbm_to_vmem [thread:$0]  %s0, 256, %s20, [#allocation3], 128, 128, 8
    $region5: #{tpu_custom_call.1} parent=1 // pred_fallthru
      _
    // Predicated region
    $region6: #{tpu_custom_call.1} parent=1 // pred_check
      _
    $region7: #{tpu_custom_call.1} parent=1 // pred_check_branch
      %27 = sbr.rel (0) target = $region9
    $region8: #{tpu_custom_call.1} parent=1 // pred_region
      %s29 = ssub.s32 256, 256
      %30 = vsyncadd [#allocation6], %s29
      %s31 = sshll.u32 [#allocation5], 4
      %s32 = int_to_ptr.vmem [resolvable:$true] %s31
      %37 = dma.hbm_to_vmem [thread:$0]  %s1, 256, %s32, [#allocation6], 128, 128, 8
    $region9: #{tpu_custom_call.1} parent=1 // pred_fallthru
      _
    // Predicated region
    $region10: #{tpu_custom_call.1} parent=1 // pred_check
      _
    $region11: #{tpu_custom_call.1} parent=1 // pred_check_branch
      %39 = sbr.rel (0) target = $region13
    $region12: #{tpu_custom_call.1} parent=1 // pred_region
      %s41 = ssub.s32 2048, 2048
      %42 = vsyncadd [#allocation6], %s41
      %s43 = sshll.u32 [#allocation7], 4
      %s44 = int_to_ptr.vmem [resolvable:$true] %s43
      %49 = dma.hbm_to_vmem [thread:$0]  %s2, 2048, %s44, [#allocation6], 128, 128, 8
    $region13: #{tpu_custom_call.1} parent=1 // pred_fallthru
      _
    // Predicated region
    $region14: #{tpu_custom_call.1} parent=1 // pred_check
      _
    $region15: #{tpu_custom_call.1} parent=1 // pred_check_branch
      %51 = sbr.rel (0) target = $region17
    $region16: #{tpu_custom_call.1} parent=1 // pred_region
      %s53 = ssub.s32 2048, 2048
      %54 = vsyncadd [#allocation9], %s53
      %s55 = sshll.u32 [#allocation8], 4
      %s56 = int_to_ptr.vmem [resolvable:$true] %s55
      %61 = dma.hbm_to_vmem [thread:$0]  %s3, 2048, %s56, [#allocation9], 128, 128, 8
    $region17: #{tpu_custom_call.1} parent=1 // pred_fallthru
      _
    // Predicated region
    $region18: #{tpu_custom_call.1} parent=1 // pred_check
      _
    $region19: #{tpu_custom_call.1} parent=1 // pred_check_branch
      %63 = sbr.rel (0) target = $region21
    $region20: #{tpu_custom_call.1} parent=1 // pred_region
      _
    $region21: #{tpu_custom_call.1} parent=1 // pred_fallthru
      _
    // Predicated region
    $region22: #{tpu_custom_call.1} parent=1 // pred_check
      _
    $region23: #{tpu_custom_call.1} parent=1 // pred_check_branch
      %65 = sbr.rel (0) target = $region25
    $region24: #{tpu_custom_call.1} parent=1 // pred_region
      %66 = dma.done [#allocation3], 256
    $region25: #{tpu_custom_call.1} parent=1 // pred_fallthru
      _
    // Predicated region
    $region26: #{tpu_custom_call.1} parent=1 // pred_check
      _
    $region27: #{tpu_custom_call.1} parent=1 // pred_check_branch
      %68 = sbr.rel (0) target = $region29
    $region28: #{tpu_custom_call.1} parent=1 // pred_region
      %69 = dma.done [#allocation6], 256
    $region29: #{tpu_custom_call.1} parent=1 // pred_fallthru
      _
    // Predicated region
    $region30: #{tpu_custom_call.1} parent=1 // pred_check
      _
    $region31: #{tpu_custom_call.1} parent=1 // pred_check_branch
      %71 = sbr.rel (0) target = $region33
    $region32: #{tpu_custom_call.1} parent=1 // pred_region
      %72 = dma.done [#allocation6], 2048
    $region33: #{tpu_custom_call.1} parent=1 // pred_fallthru
      _
    // Predicated region
    $region34: #{tpu_custom_call.1} parent=1 // pred_check
      _
    $region35: #{tpu_custom_call.1} parent=1 // pred_check_branch
      %74 = sbr.rel (0) target = $region37
    $region36: #{tpu_custom_call.1} parent=1 // pred_region
      %75 = dma.done [#allocation9], 2048
    $region37: #{tpu_custom_call.1} parent=1 // pred_fallthru
      _
    %v76 = vld [vmem:[#allocation2] sm:$0xff]
    %v77 = vld [vmem:[#allocation2 + $0x8] sm:$0xff]
    %v78 = vld [vmem:[#allocation7] sm:$0xff]
    %v79 = vld [vmem:[#allocation7 + $0x8] sm:$0xff]
    %v80 = vld [vmem:[#allocation7 + $0x10] sm:$0xff]
    %v81 = vld [vmem:[#allocation7 + $0x18] sm:$0xff]
    %v82 = vld [vmem:[#allocation7 + $0x20] sm:$0xff]
    %v83 = vld [vmem:[#allocation7 + $0x28] sm:$0xff]
    %v84 = vld [vmem:[#allocation7 + $0x30] sm:$0xff]
    %v85 = vld [vmem:[#allocation7 + $0x38] sm:$0xff]
    %v86 = vld [vmem:[#allocation7 + $0x40] sm:$0xff]
    %v87 = vld [vmem:[#allocation7 + $0x48] sm:$0xff]
    %v88 = vld [vmem:[#allocation7 + $0x50] sm:$0xff]
    %v89 = vld [vmem:[#allocation7 + $0x58] sm:$0xff]
    %v90 = vld [vmem:[#allocation7 + $0x60] sm:$0xff]
    %v91 = vld [vmem:[#allocation7 + $0x68] sm:$0xff]
    %v92 = vld [vmem:[#allocation7 + $0x70] sm:$0xff]
    %v93 = vld [vmem:[#allocation7 + $0x78] sm:$0xff]
    %94 = vmatprep.subr.mxu0 0.0
    %95 = vmatpush1.msra.mxu0 %v93
    %96 = vmatprep.subr.mxu0 0.0
    %97 = vmatpush1.msra.mxu0 %v92
    %98 = vmatprep.subr.mxu0 0.0
    %99 = vmatpush1.msra.mxu0 %v91
    %100 = vmatprep.subr.mxu0 0.0
    %101 = vmatpush1.msra.mxu0 %v90
    %102 = vmatprep.subr.mxu0 0.0
    %103 = vmatpush1.msra.mxu0 %v89
    %104 = vmatprep.subr.mxu0 0.0
    %105 = vmatpush1.msra.mxu0 %v88
    %106 = vmatprep.subr.mxu0 0.0
    %107 = vmatpush1.msra.mxu0 %v87
    %108 = vmatprep.subr.mxu0 0.0
    %109 = vmatpush1.msra.mxu0 %v86
    %110 = vmatprep.subr.mxu0 0.0
    %111 = vmatpush1.msra.mxu0 %v85
    %112 = vmatprep.subr.mxu0 0.0
    %113 = vmatpush1.msra.mxu0 %v84
    %114 = vmatprep.subr.mxu0 0.0
    %115 = vmatpush1.msra.mxu0 %v83
    %116 = vmatprep.subr.mxu0 0.0
    %117 = vmatpush1.msra.mxu0 %v82
    %118 = vmatprep.subr.mxu0 0.0
    %119 = vmatpush1.msra.mxu0 %v81
    %120 = vmatprep.subr.mxu0 0.0
    %121 = vmatpush1.msra.mxu0 %v80
    %122 = vmatprep.subr.mxu0 0.0
    %123 = vmatpush1.msra.mxu0 %v79
    %124 = vmatprep.subr.mxu0 0.0
    %125 = vmatpush1.msra.mxu0 %v78
    %126 = vmatprep.subr.mxu0 0.0
    %127 = vmatpush2.msra.mxu0 0.0
    %128 = vmatprep.subr.mxu0 0.0
    %129 = vmatpush2.msra.mxu0 0.0
    %130 = vmatprep.subr.mxu0 0.0
    %131 = vmatpush2.msra.mxu0 0.0
    %132 = vmatprep.subr.mxu0 0.0
    %133 = vmatpush2.msra.mxu0 0.0
    %134 = vmatprep.subr.mxu0 0.0
    %135 = vmatpush2.msra.mxu0 0.0
    %136 = vmatprep.subr.mxu0 0.0
    %137 = vmatpush2.msra.mxu0 0.0
    %138 = vmatprep.subr.mxu0 0.0
    %139 = vmatpush2.msra.mxu0 0.0
    %140 = vmatprep.subr.mxu0 0.0
    %141 = vmatpush2.msra.mxu0 0.0
    %142 = vmatprep.subr.mxu0 0.0
    %143 = vmatpush2.msra.mxu0 0.0
    %144 = vmatprep.subr.mxu0 0.0
    %145 = vmatpush2.msra.mxu0 0.0
    %146 = vmatprep.subr.mxu0 0.0
    %147 = vmatpush2.msra.mxu0 0.0
    %148 = vmatprep.subr.mxu0 0.0
    %149 = vmatpush2.msra.mxu0 0.0
    %150 = vmatprep.subr.mxu0 0.0
    %151 = vmatpush2.msra.mxu0 0.0
    %152 = vmatprep.subr.mxu0 0.0
    %153 = vmatpush2.msra.mxu0 0.0
    %154 = vmatprep.subr.mxu0 0.0
    %155 = vmatpush2.msra.mxu0 0.0
    %156 = vmatprep.subr.mxu0 0.0
    %157 = vmatpush2.msra.mxu0 0.0
    %158 = vmatprep.mubr.f32.mxu0 0.0
    %159 = vmatmul.mubr.f32.gmra.mxu0 %v76
    %v160 = vpop.f32.mrf.mxu0
    %v161 = vadd.f32 0.0, %v160
    %v162 = vpop.f32.mrf.mxu0
    %163 = vmatprep.mubr.f32.mxu0 0.0
    %164 = vmatmul.mubr.f32.gmra.mxu0 %v77
    %v165 = vpop.f32.mrf.mxu0
    %v166 = vadd.f32 0.0, %v165
    %v167 = vpop.f32.mrf.mxu0
    %168 = vdwg.mxu0
    %v169 = vld [vmem:[#allocation5] sm:$0xff]
    %v170 = vld [vmem:[#allocation5 + $0x8] sm:$0xff]
    %v171 = vld [vmem:[#allocation8] sm:$0xff]
    %v172 = vld [vmem:[#allocation8 + $0x8] sm:$0xff]
    %v173 = vld [vmem:[#allocation8 + $0x10] sm:$0xff]
    %v174 = vld [vmem:[#allocation8 + $0x18] sm:$0xff]
    %v175 = vld [vmem:[#allocation8 + $0x20] sm:$0xff]
    %v176 = vld [vmem:[#allocation8 + $0x28] sm:$0xff]
    %v177 = vld [vmem:[#allocation8 + $0x30] sm:$0xff]
    %v178 = vld [vmem:[#allocation8 + $0x38] sm:$0xff]
    %v179 = vld [vmem:[#allocation8 + $0x40] sm:$0xff]
    %v180 = vld [vmem:[#allocation8 + $0x48] sm:$0xff]
    %v181 = vld [vmem:[#allocation8 + $0x50] sm:$0xff]
    %v182 = vld [vmem:[#allocation8 + $0x58] sm:$0xff]
    %v183 = vld [vmem:[#allocation8 + $0x60] sm:$0xff]
    %v184 = vld [vmem:[#allocation8 + $0x68] sm:$0xff]
    %v185 = vld [vmem:[#allocation8 + $0x70] sm:$0xff]
    %v186 = vld [vmem:[#allocation8 + $0x78] sm:$0xff]
    %187 = vmatprep.subr.mxu0 0.0
    %188 = vmatpush1.msra.mxu0 %v186
    %189 = vmatprep.subr.mxu0 0.0
    %190 = vmatpush1.msra.mxu0 %v185
    %191 = vmatprep.subr.mxu0 0.0
    %192 = vmatpush1.msra.mxu0 %v184
    %193 = vmatprep.subr.mxu0 0.0
    %194 = vmatpush1.msra.mxu0 %v183
    %195 = vmatprep.subr.mxu0 0.0
    %196 = vmatpush1.msra.mxu0 %v182
    %197 = vmatprep.subr.mxu0 0.0
    %198 = vmatpush1.msra.mxu0 %v181
    %199 = vmatprep.subr.mxu0 0.0
    %200 = vmatpush1.msra.mxu0 %v180
    %201 = vmatprep.subr.mxu0 0.0
    %202 = vmatpush1.msra.mxu0 %v179
    %203 = vmatprep.subr.mxu0 0.0
    %204 = vmatpush1.msra.mxu0 %v178
    %205 = vmatprep.subr.mxu0 0.0
    %206 = vmatpush1.msra.mxu0 %v177
    %207 = vmatprep.subr.mxu0 0.0
    %208 = vmatpush1.msra.mxu0 %v176
    %209 = vmatprep.subr.mxu0 0.0
    %210 = vmatpush1.msra.mxu0 %v175
    %211 = vmatprep.subr.mxu0 0.0
    %212 = vmatpush1.msra.mxu0 %v174
    %213 = vmatprep.subr.mxu0 0.0
    %214 = vmatpush1.msra.mxu0 %v173
    %215 = vmatprep.subr.mxu0 0.0
    %216 = vmatpush1.msra.mxu0 %v172
    %217 = vmatprep.subr.mxu0 0.0
    %218 = vmatpush1.msra.mxu0 %v171
    %219 = vmatprep.subr.mxu0 0.0
    %220 = vmatpush2.msra.mxu0 0.0
    %221 = vmatprep.subr.mxu0 0.0
    %222 = vmatpush2.msra.mxu0 0.0
    %223 = vmatprep.subr.mxu0 0.0
    %224 = vmatpush2.msra.mxu0 0.0
    %225 = vmatprep.subr.mxu0 0.0
    %226 = vmatpush2.msra.mxu0 0.0
    %227 = vmatprep.subr.mxu0 0.0
    %228 = vmatpush2.msra.mxu0 0.0
    %229 = vmatprep.subr.mxu0 0.0
    %230 = vmatpush2.msra.mxu0 0.0
    %231 = vmatprep.subr.mxu0 0.0
    %232 = vmatpush2.msra.mxu0 0.0
    %233 = vmatprep.subr.mxu0 0.0
    %234 = vmatpush2.msra.mxu0 0.0
    %235 = vmatprep.subr.mxu0 0.0
    %236 = vmatpush2.msra.mxu0 0.0
    %237 = vmatprep.subr.mxu0 0.0
    %238 = vmatpush2.msra.mxu0 0.0
    %239 = vmatprep.subr.mxu0 0.0
    %240 = vmatpush2.msra.mxu0 0.0
    %241 = vmatprep.subr.mxu0 0.0
    %242 = vmatpush2.msra.mxu0 0.0
    %243 = vmatprep.subr.mxu0 0.0
    %244 = vmatpush2.msra.mxu0 0.0
    %245 = vmatprep.subr.mxu0 0.0
    %246 = vmatpush2.msra.mxu0 0.0
    %247 = vmatprep.subr.mxu0 0.0
    %248 = vmatpush2.msra.mxu0 0.0
    %249 = vmatprep.subr.mxu0 0.0
    %250 = vmatpush2.msra.mxu0 0.0
    %251 = vmatprep.mubr.f32.mxu0 0.0
    %252 = vmatmul.mubr.f32.gmra.mxu0 %v169
    %v253 = vpop.f32.mrf.mxu0
    %v254 = vadd.f32 0.0, %v253
    %v255 = vpop.f32.mrf.mxu0
    %256 = vmatprep.mubr.f32.mxu0 0.0
    %257 = vmatmul.mubr.f32.gmra.mxu0 %v170
    %v258 = vpop.f32.mrf.mxu0
    %v259 = vadd.f32 0.0, %v258
    %v260 = vpop.f32.mrf.mxu0
    %261 = vdwg.mxu0
    %v262 = vld [vmem:[%s4] sm:$0x3]
    %v263 = vlaneseq
    %v264 = vshrl.u32 %v263, 7
    %v265 = vsub.s32 0, %v264
    %v266 = vrot.slane %v262, %v265
    %v267 = vadd.f32 %v161, %v266
    %v268 = vadd.f32 %v166, %v266
    %v269 = vadd.f32 %v161, %v254
    %v270 = vadd.f32 %v166, %v259
    %v271 = vlaneseq
    %v272 = vshrl.u32 %v271, 7
    %v273 = vsub.s32 1, %v272
    %v274 = vrot.slane %v262, %v273
    %v275 = vadd.f32 %v269, %v274
    %v276 = vadd.f32 %v270, %v274
    %v277 = vxor.u32 %v275, 2147483648
    %v278 = vxor.u32 %v276, 2147483648
    %v279 = vmul.f32 %v277, 1.442695
    %v280 = vpow.pop %v279
    %v281 = vmul.f32 %v278, 1.442695
    %v282 = vpow.pop %v281
    %v283 = vadd.f32 %v280, 1.0
    %v284 = vadd.f32 %v282, 1.0
    %v285 = vrcp.pop %v283
    %v286 = vmul.f32 1.0, %v285
    %v287 = vrcp.pop %v284
    %v288 = vmul.f32 1.0, %v287
    %v289 = vmul.f32 %v267, %v286
    %v290 = vmul.f32 %v268, %v288
    %291 = vst [vmem:[#allocation10] sm:$0xff] %v289
    %292 = vst [vmem:[#allocation10 + $0x8] sm:$0xff] %v290
    // Predicated region
    $region38: #{tpu_custom_call.1} parent=1 // pred_check
      _
    $region39: #{tpu_custom_call.1} parent=1 // pred_check_branch
      %294 = sbr.rel (0) target = $region41
    $region40: #{tpu_custom_call.1} parent=1 // pred_region
      %s296 = ssub.s32 256, 256
      %297 = vsyncadd [#allocation4], %s296
      %s298 = sshll.u32 [#allocation10], 4
      %s299 = int_to_ptr.vmem [resolvable:$true] %s298
      %304 = dma.vmem_to_hbm [thread:$0]  %s299, 256, %s5, [#allocation4], 128, 128, 8
    $region41: #{tpu_custom_call.1} parent=1 // pred_fallthru
      _
    // Predicated region
    $region42: #{tpu_custom_call.1} parent=1 // pred_check
      _
    $region43: #{tpu_custom_call.1} parent=1 // pred_check_branch
      %306 = sbr.rel (0) target = $region45
    $region44: #{tpu_custom_call.1} parent=1 // pred_region
      %307 = dma.done [#allocation4], 256
    $region45: #{tpu_custom_call.1} parent=1 // pred_fallthru
      _
    %308 = vsyncpa [#allocation3], 1
    %309 = vsyncpa [#allocation6], 1
    %310 = vsyncpa [#allocation9], 1
    %311 = vsyncpa [#allocation4], 1

</llo_original>
